<compile_context>
chip_gen: v7x
topology: tpu7x:2x2x1
jax: 0.10.0
libtpu: 0.0.40
codegen_flags: <defaults>
</compile_context>

<pallas_src>
import jax
import jax.numpy as jnp
from jax.experimental import pallas as pl
from jax.experimental.pallas import tpu as pltpu


def policy_kernel(x_ref, w1_ref, b1_ref, w2_ref, b2_ref, w3_ref, b3_ref, o_ref):
    x = x_ref[...]        # (bm, S) f32
    w1 = w1_ref[...]      # (S, H)  f32
    b1 = b1_ref[...]      # (1, H)  f32

    # Linear(state_size, 128) -> Dropout(0.5) [identity in eval] -> ReLU.
    # K = S = 4 would underfill the MXU, so do 4 unrolled broadcast FMAs on
    # the VPU in f32.
    # TODO(synk): training-mode Dropout(0.5) (pltpu.prng_* masking) not implemented; eval-mode identity used.
    h1 = b1
    for k in range(x.shape[-1]):
        h1 = h1 + x[:, k:k + 1] * w1[k:k + 1, :]
    h1 = jnp.maximum(h1, 0.0)

    # Linear(128, 128) -> ReLU. bf16 operands only for the MXU, f32 everywhere else.
    h2 = jnp.dot(h1.astype(w2_ref.dtype), w2_ref[...],
                 preferred_element_type=jnp.float32) + b2_ref[...]
    h2 = jnp.maximum(h2, 0.0)

    # Linear(128, A_pad=128) -> Softmax(dim=-1), numerically stable.
    # Padded columns carry zero weights + -1e30 bias, so they exp() to 0 and do
    # not perturb the normalization of the real columns.
    logits = jnp.dot(h2.astype(w3_ref.dtype), w3_ref[...],
                     preferred_element_type=jnp.float32) + b3_ref[...]
    m = jnp.max(logits, axis=-1, keepdims=True)
    e = jnp.exp(logits - m)
    denom = jnp.sum(e, axis=-1, keepdims=True)
    # Exact normalization (not approx reciprocal) so probabilities sum to 1.
    o_ref[...] = (e / denom).astype(o_ref.dtype)


def _round_up(x, m):
    return ((x + m - 1) // m) * m


def policy_forward(state, w1, b1, w2, b2, w3, b3, *, bm=128):
    """state: [B, state_size] f32. Returns action probabilities [B, action_size] f32."""
    B, S = state.shape
    H = w1.shape[1]
    A = w3.shape[1]
    LANES = 128
    A_pad = _round_up(max(A, LANES), LANES)   # lane-dense output width

    x = state.astype(jnp.float32)             # layer 1 stays f32 on the VPU
    w1c = w1.astype(jnp.float32)
    b1c = b1.astype(jnp.float32).reshape(1, H)
    w2c = w2.astype(jnp.bfloat16)             # MXU operands
    b2c = b2.astype(jnp.float32).reshape(1, H)

    # Pad final layer to 128 lanes: zero weight columns + large-negative bias.
    w3p = jnp.zeros((H, A_pad), jnp.float32).at[:, :A].set(w3).astype(jnp.bfloat16)
    b3p = jnp.full((1, A_pad), -1e30, jnp.float32).at[:, :A].set(
        b3.astype(jnp.float32).reshape(1, A))

    # Batch tile: multiple of 8 (f32 sublane); pad batch so it divides evenly.
    bm = bm if B >= bm else _round_up(B, 8)
    Bp = _round_up(B, bm)
    if Bp != B:
        x = jnp.pad(x, ((0, Bp - B), (0, 0)))

    grid = (Bp // bm,)
    const = lambda shape: pl.BlockSpec(shape, lambda i: (0, 0))  # VMEM-resident weights

    out = pl.pallas_call(
        policy_kernel,
        out_shape=jax.ShapeDtypeStruct((Bp, A_pad), jnp.float32),
        grid=grid,
        in_specs=[
            pl.BlockSpec((bm, S), lambda i: (i, 0)),   # x: streamed over batch
            const((S, H)), const((1, H)),
            const((H, H)), const((1, H)),
            const((H, A_pad)), const((1, A_pad)),
        ],
        out_specs=pl.BlockSpec((bm, A_pad), lambda i: (i, 0)),
        compiler_params=pltpu.CompilerParams(
            dimension_semantics=("parallel",)),        # shards across v7x's 2 TCs
    )(x, w1c, b1c, w2c, b2c, w3p, b3p)

    return out[:B, :A]


def init_params(key, state_size, action_size, hidden=128):
    """Deterministic init mimicking nn.Linear's U(-1/sqrt(fan_in), 1/sqrt(fan_in))."""
    ks = jax.random.split(key, 6)

    def lin(kw, kb, fan_in, fan_out):
        bound = 1.0 / jnp.sqrt(fan_in)
        # weight stored already transposed: [in, out]
        w = jax.random.uniform(kw, (fan_in, fan_out), jnp.float32, -bound, bound)
        b = jax.random.uniform(kb, (1, fan_out), jnp.float32, -bound, bound)
        return w, b

    w1, b1 = lin(ks[0], ks[1], state_size, hidden)
    w2, b2 = lin(ks[2], ks[3], hidden, hidden)
    w3, b3 = lin(ks[4], ks[5], hidden, action_size)
    return w1, b1, w2, b2, w3, b3


if __name__ == "__main__":
    # CartPole: state_size=4, action_size=2. Batch of 256 states (a rollout's
    # worth) tiled as two 128-row grid steps to exercise the parallel batch grid.
    B, STATE, ACTION = 256, 4, 2
    key = jax.random.PRNGKey(0)
    k_x, k_p = jax.random.split(key)

    state = jax.random.normal(k_x, (B, STATE), dtype=jnp.float32)
    params = init_params(k_p, STATE, ACTION)

    probs = policy_forward(state, *params)
    probs = jax.block_until_ready(probs)
    assert probs.shape == (B, ACTION)

    w1, b1, w2, b2, w3, b3 = params

    # Reference 1: matched numerics (layer 1 f32, layers 2/3 bf16 operands / f32 acc).
    h1f = jnp.maximum(state @ w1 + b1, 0.0)
    h2m = jnp.maximum(jnp.dot(h1f.astype(jnp.bfloat16), w2.astype(jnp.bfloat16),
                              preferred_element_type=jnp.float32) + b2, 0.0)
    logits_m = jnp.dot(h2m.astype(jnp.bfloat16), w3.astype(jnp.bfloat16),
                       preferred_element_type=jnp.float32) + b3
    ref_matched = jax.nn.softmax(logits_m, axis=-1)

    # Reference 2: pure f32 module semantics (eval-mode dropout = identity).
    h2f = jnp.maximum(h1f @ w2 + b2, 0.0)
    ref_f32 = jax.nn.softmax(h2f @ w3 + b3, axis=-1)

    assert jnp.allclose(probs, ref_matched, atol=2e-3, rtol=2e-3), "mismatch vs matched reference"
    assert jnp.allclose(probs, ref_f32, atol=3e-2, rtol=3e-2), "mismatch vs f32 reference"
    assert jnp.allclose(jnp.sum(probs, axis=-1), 1.0, atol=2e-3)
    assert bool(jnp.all(jnp.isfinite(probs)))

    print("KERNEL_OK")
</pallas_src>

<mosaic_0001>
module attributes {stable_mosaic.version = 11 : i64} {
  func.func @policy_kernel(%arg0: i32, %arg1: memref<128x4xf32, #tpu.memory_space<vmem>>, %arg2: memref<4x128xf32, #tpu.memory_space<vmem>>, %arg3: memref<1x128xf32, #tpu.memory_space<vmem>>, %arg4: memref<128x128xbf16, #tpu.memory_space<vmem>>, %arg5: memref<1x128xf32, #tpu.memory_space<vmem>>, %arg6: memref<128x128xbf16, #tpu.memory_space<vmem>>, %arg7: memref<1x128xf32, #tpu.memory_space<vmem>>, %arg8: memref<128x128xf32, #tpu.memory_space<vmem>>) attributes {dimension_semantics = [#tpu.dimension_semantics<parallel>], iteration_bounds = array<i64: 2>, scalar_prefetch = 0 : i64, scratch_operands = 0 : i64, tpu.core_type = #tpu.core_type<tc>, window_params = [{transform_indices = @transform_0, window_bounds = array<i64: 128, 4>}, {pipeline_mode = #tpu.pipeline_mode<synchronous>, transform_indices = @transform_1, window_bounds = array<i64: 4, 128>}, {pipeline_mode = #tpu.pipeline_mode<synchronous>, transform_indices = @transform_2, window_bounds = array<i64: 1, 128>}, {pipeline_mode = #tpu.pipeline_mode<synchronous>, transform_indices = @transform_3, window_bounds = array<i64: 128, 128>}, {pipeline_mode = #tpu.pipeline_mode<synchronous>, transform_indices = @transform_4, window_bounds = array<i64: 1, 128>}, {pipeline_mode = #tpu.pipeline_mode<synchronous>, transform_indices = @transform_5, window_bounds = array<i64: 128, 128>}, {pipeline_mode = #tpu.pipeline_mode<synchronous>, transform_indices = @transform_6, window_bounds = array<i64: 1, 128>}, {transform_indices = @transform_7, window_bounds = array<i64: 128, 128>}]} {
    %c0 = arith.constant 0 : index
    %c0_0 = arith.constant 0 : index
    %0 = vector.load %arg1[%c0, %c0_0] : memref<128x4xf32, #tpu.memory_space<vmem>>, vector<128x4xf32>
    %c0_1 = arith.constant 0 : index
    %c0_2 = arith.constant 0 : index
    %1 = vector.load %arg2[%c0_1, %c0_2] : memref<4x128xf32, #tpu.memory_space<vmem>>, vector<4x128xf32>
    %c0_3 = arith.constant 0 : index
    %c0_4 = arith.constant 0 : index
    %2 = vector.load %arg3[%c0_3, %c0_4] : memref<1x128xf32, #tpu.memory_space<vmem>>, vector<1x128xf32>
    %3 = vector.extract_strided_slice %0 {offsets = [0, 0], sizes = [128, 1], strides = [1, 1]} : vector<128x4xf32> to vector<128x1xf32>
    %4 = vector.extract_strided_slice %1 {offsets = [0, 0], sizes = [1, 128], strides = [1, 1]} : vector<4x128xf32> to vector<1x128xf32>
    %5 = vector.broadcast %3 : vector<128x1xf32> to vector<128x128xf32>
    %6 = vector.broadcast %4 : vector<1x128xf32> to vector<128x128xf32>
    %7 = arith.mulf %5, %6 : vector<128x128xf32>
    %8 = vector.broadcast %2 : vector<1x128xf32> to vector<128x128xf32>
    %9 = arith.addf %8, %7 : vector<128x128xf32>
    %10 = vector.extract_strided_slice %0 {offsets = [0, 1], sizes = [128, 1], strides = [1, 1]} : vector<128x4xf32> to vector<128x1xf32>
    %11 = vector.extract_strided_slice %1 {offsets = [1, 0], sizes = [1, 128], strides = [1, 1]} : vector<4x128xf32> to vector<1x128xf32>
    %12 = vector.broadcast %10 : vector<128x1xf32> to vector<128x128xf32>
    %13 = vector.broadcast %11 : vector<1x128xf32> to vector<128x128xf32>
    %14 = arith.mulf %12, %13 : vector<128x128xf32>
    %15 = arith.addf %9, %14 : vector<128x128xf32>
    %16 = vector.extract_strided_slice %0 {offsets = [0, 2], sizes = [128, 1], strides = [1, 1]} : vector<128x4xf32> to vector<128x1xf32>
    %17 = vector.extract_strided_slice %1 {offsets = [2, 0], sizes = [1, 128], strides = [1, 1]} : vector<4x128xf32> to vector<1x128xf32>
    %18 = vector.broadcast %16 : vector<128x1xf32> to vector<128x128xf32>
    %19 = vector.broadcast %17 : vector<1x128xf32> to vector<128x128xf32>
    %20 = arith.mulf %18, %19 : vector<128x128xf32>
    %21 = arith.addf %15, %20 : vector<128x128xf32>
    %22 = vector.extract_strided_slice %0 {offsets = [0, 3], sizes = [128, 1], strides = [1, 1]} : vector<128x4xf32> to vector<128x1xf32>
    %23 = vector.extract_strided_slice %1 {offsets = [3, 0], sizes = [1, 128], strides = [1, 1]} : vector<4x128xf32> to vector<1x128xf32>
    %24 = vector.broadcast %22 : vector<128x1xf32> to vector<128x128xf32>
    %25 = vector.broadcast %23 : vector<1x128xf32> to vector<128x128xf32>
    %26 = arith.mulf %24, %25 : vector<128x128xf32>
    %27 = arith.addf %21, %26 : vector<128x128xf32>
    %cst = arith.constant 0.000000e+00 : f32
    %28 = vector.broadcast %cst : f32 to vector<128x128xf32>
    %29 = arith.maximumf %27, %28 : vector<128x128xf32>
    %30 = arith.truncf %29 : vector<128x128xf32> to vector<128x128xbf16>
    %c0_5 = arith.constant 0 : index
    %c0_6 = arith.constant 0 : index
    %31 = vector.load %arg4[%c0_5, %c0_6] : memref<128x128xbf16, #tpu.memory_space<vmem>>, vector<128x128xbf16>
    %cst_7 = arith.constant dense<0.000000e+00> : vector<128x128xf32>
    %32 = tpu.matmul %30, %31, %cst_7 {dimension_numbers = #tpu.dot_dimension_numbers<[1], [0], [0], [1], [0, 0, 1, 1], [], []>} : vector<128x128xbf16>, vector<128x128xbf16>, vector<128x128xf32> -> vector<128x128xf32>
    %c0_8 = arith.constant 0 : index
    %c0_9 = arith.constant 0 : index
    %33 = vector.load %arg5[%c0_8, %c0_9] : memref<1x128xf32, #tpu.memory_space<vmem>>, vector<1x128xf32>
    %34 = vector.broadcast %33 : vector<1x128xf32> to vector<128x128xf32>
    %35 = arith.addf %32, %34 : vector<128x128xf32>
    %cst_10 = arith.constant 0.000000e+00 : f32
    %36 = vector.broadcast %cst_10 : f32 to vector<128x128xf32>
    %37 = arith.maximumf %35, %36 : vector<128x128xf32>
    %38 = arith.truncf %37 : vector<128x128xf32> to vector<128x128xbf16>
    %c0_11 = arith.constant 0 : index
    %c0_12 = arith.constant 0 : index
    %39 = vector.load %arg6[%c0_11, %c0_12] : memref<128x128xbf16, #tpu.memory_space<vmem>>, vector<128x128xbf16>
    %cst_13 = arith.constant dense<0.000000e+00> : vector<128x128xf32>
    %40 = tpu.matmul %38, %39, %cst_13 {dimension_numbers = #tpu.dot_dimension_numbers<[1], [0], [0], [1], [0, 0, 1, 1], [], []>} : vector<128x128xbf16>, vector<128x128xbf16>, vector<128x128xf32> -> vector<128x128xf32>
    %c0_14 = arith.constant 0 : index
    %c0_15 = arith.constant 0 : index
    %41 = vector.load %arg7[%c0_14, %c0_15] : memref<1x128xf32, #tpu.memory_space<vmem>>, vector<1x128xf32>
    %42 = vector.broadcast %41 : vector<1x128xf32> to vector<128x128xf32>
    %43 = arith.addf %40, %42 : vector<128x128xf32>
    %cst_16 = arith.constant dense<0xFF800000> : vector<128xf32>
    %44 = vector.multi_reduction <maximumf>, %43, %cst_16 [1] : vector<128x128xf32> to vector<128xf32>
    %45 = vector.shape_cast %44 : vector<128xf32> to vector<128x1xf32>
    %46 = vector.broadcast %45 : vector<128x1xf32> to vector<128x128xf32>
    %47 = arith.subf %43, %46 : vector<128x128xf32>
    %48 = math.exp %47 : vector<128x128xf32>
    %cst_17 = arith.constant dense<0.000000e+00> : vector<128xf32>
    %49 = vector.multi_reduction <add>, %48, %cst_17 [1] : vector<128x128xf32> to vector<128xf32>
    %50 = vector.shape_cast %49 : vector<128xf32> to vector<128x1xf32>
    %51 = vector.broadcast %50 : vector<128x1xf32> to vector<128x128xf32>
    %52 = arith.divf %48, %51 : vector<128x128xf32>
    %c0_18 = arith.constant 0 : index
    %c0_19 = arith.constant 0 : index
    %53 = vector.load %arg8[%c0_18, %c0_19] : memref<128x128xf32, #tpu.memory_space<vmem>>, vector<128x128xf32>
    tpu.vector_store %arg8[%c0_18, %c0_19], %52 {strides = array<i32>} : memref<128x128xf32, #tpu.memory_space<vmem>>, vector<128x128xf32>,
    return
  }
  func.func @transform_0(%arg0: i32) -> (i32, i32) {
    %c0_i32 = arith.constant 0 : i32
    %c0_i32_0 = arith.constant 0 : i32
    return %arg0, %c0_i32 : i32, i32
  }
  func.func @transform_1(%arg0: i32) -> (i32, i32) {
    %c0_i32 = arith.constant 0 : i32
    %c0_i32_0 = arith.constant 0 : i32
    %c0_i32_1 = arith.constant 0 : i32
    return %c0_i32, %c0_i32_0 : i32, i32
  }
  func.func @transform_2(%arg0: i32) -> (i32, i32) {
    %c0_i32 = arith.constant 0 : i32
    %c0_i32_0 = arith.constant 0 : i32
    %c0_i32_1 = arith.constant 0 : i32
    return %c0_i32, %c0_i32_0 : i32, i32
  }
  func.func @transform_3(%arg0: i32) -> (i32, i32) {
    %c0_i32 = arith.constant 0 : i32
    %c0_i32_0 = arith.constant 0 : i32
    %c0_i32_1 = arith.constant 0 : i32
    return %c0_i32, %c0_i32_0 : i32, i32
  }
  func.func @transform_4(%arg0: i32) -> (i32, i32) {
    %c0_i32 = arith.constant 0 : i32
    %c0_i32_0 = arith.constant 0 : i32
    %c0_i32_1 = arith.constant 0 : i32
    return %c0_i32, %c0_i32_0 : i32, i32
  }
  func.func @transform_5(%arg0: i32) -> (i32, i32) {
    %c0_i32 = arith.constant 0 : i32
    %c0_i32_0 = arith.constant 0 : i32
    %c0_i32_1 = arith.constant 0 : i32
    return %c0_i32, %c0_i32_0 : i32, i32
  }
  func.func @transform_6(%arg0: i32) -> (i32, i32) {
    %c0_i32 = arith.constant 0 : i32
    %c0_i32_0 = arith.constant 0 : i32
    %c0_i32_1 = arith.constant 0 : i32
    return %c0_i32, %c0_i32_0 : i32, i32
  }
  func.func @transform_7(%arg0: i32) -> (i32, i32) {
    %c0_i32 = arith.constant 0 : i32
    %c0_i32_0 = arith.constant 0 : i32
    return %arg0, %c0_i32 : i32, i32
  }
}

</mosaic_0001>

<llo_original>
// kernel: tpu_custom_call.1
$region0: #{tpu_custom_call.1}
  #allocation0 [shape = 'u32[]', space=smem, size = 0x4, offset = 0x4, fixed_abs, tag = 'smem constant byte address 0x4 - core index']
  #allocation1 [shape = 'u32[144,128]{1,0:T(1,128)}', space=vmem, size = 0x12000, scoped, tag = 'internal scratch']
  %s0 = inlined_call_operand.vmem [shape: f32[256,4], index: 0, kind: input, shape index: {}]
  %s1 = inlined_call_operand.vmem [shape: f32[4,128], index: 1, kind: input, shape index: {}]
  %s2 = inlined_call_operand.vmem [shape: f32[1,128], index: 2, kind: input, shape index: {}]
  %s3 = inlined_call_operand.vmem [shape: bf16[128,128], index: 3, kind: input, shape index: {}]
  %s4 = inlined_call_operand.vmem [shape: f32[1,128], index: 4, kind: input, shape index: {}]
  %s5 = inlined_call_operand.vmem [shape: bf16[128,128], index: 5, kind: input, shape index: {}]
  %s6 = inlined_call_operand.vmem [shape: f32[1,128], index: 6, kind: input, shape index: {}]
  %s7 = inlined_call_operand.hbm [shape: f32[256,128], index: 7, kind: output, shape index: {}]
  %s8 = sld [smem:[#allocation0]]
  $region61: #{tpu_custom_call.1} parent=0
    _
  %s10 = ssub.s32 1, %s8
  %s11 = scalar_select 0, %s10, %s8
  $region1: #{tpu_custom_call.1} parent=0
    #allocation2 [shape = 'u8[131072]{0}', space=vmem, size = 0x20000, scoped, tag = 'output window, operand 0']
    #allocation3 [shape = 's32[2]{0}', space=sflag, size = 0x8, scoped, tag = 'scoped memory for tpu_custom_call.1']
    %12 = vsyncpa [#allocation3], 0
    %s13 = scalar_lea.sflag [#allocation3], 1
    %14 = vsyncpa %s13, 0
    loop: start=0, step=1, limit=4
    $region2: #{tpu_custom_call.1} parent=1 // loop_pre_header
      _
    $region3: #{tpu_custom_call.1} parent=1 // loop_header
      %s16 = sphi 0, %s20
      %p17 = scmp.ge.s32.totalorder %s16, 4
      %s26 = sphi 0, %s28
      %s29 = sphi 0, %s26
      %s30 = sphi 0, %s29
      %s46 = sphi 0, %s30
      %s50 = sphi 0, %s50
      %s52 = sphi 0, %s50
      %s53 = sphi 0, %s52
      %s67 = sphi 0, %s53
      %s71 = sphi 0, %s71
      %s73 = sphi 0, %s71
      %s74 = sphi 0, %s73
      %s88 = sphi 0, %s74
      %s92 = sphi 0, %s92
      %s94 = sphi 0, %s92
      %s95 = sphi 0, %s94
      %s109 = sphi 0, %s95
      %s113 = sphi 0, %s113
      %s115 = sphi 0, %s113
      %s116 = sphi 0, %s115
      %s130 = sphi 0, %s116
      %s134 = sphi 0, %s134
      %s136 = sphi 0, %s134
      %s137 = sphi 0, %s136
      %s151 = sphi 0, %s137
      %s155 = sphi 0, %s155
      %s157 = sphi 0, %s155
      %s158 = sphi 0, %s157
      %s172 = sphi 0, %s158
      %s178 = sphi 0, %s180
      %s181 = sphi 0, %s178
      %s182 = sphi 0, %s181
      %s198 = sphi 0, %s182
    $region4: #{tpu_custom_call.1} parent=1 // loop_header_branch
      %19 = sbr.rel (%p17) target = $region8
    $region5: #{tpu_custom_call.1} parent=1 // loop_body
      %s21 = ssub.s32 %s16, 1
      %s22 = ssub.s32 %s16, 2
      %s23 = sadd.s32 %s16, 1
      %s24 = ssub.s32 %s16, %s23
      %p25 = scmp.eq.s32.totalorder %s24, 0
      %s27 = sadd.s32 %s26, 1
      %s28 = scalar_select %p25, %s26, %s27
      %p31 = pneg %p25
      %p32 = scmp.eq.s32.totalorder %s16, 1
      %p33 = por %p31, %p32
      %p34 = scmp.ne.s32.totalorder %s26, %s29
      %p35 = scmp.eq.s32.totalorder %s16, 0
      %p36 = por %p34, %p35
      %p37 = scmp.ne.s32.totalorder %s26, %s29
      %p38 = scmp.eq.s32.totalorder %s21, 1
      %p39 = por %p37, %p38
      %p40 = scmp.ne.s32.totalorder %s29, %s30
      %p41 = scmp.eq.s32.totalorder %s21, 0
      %p42 = por %p40, %p41
      %p43 = scmp.ne.s32.totalorder %s29, %s30
      %p44 = scmp.eq.s32.totalorder %s22, 1
      %p45 = por %p43, %p44
      %p47 = scmp.ne.s32.totalorder %s30, %s46
      %p48 = scmp.eq.s32.totalorder %s22, 0
      %p49 = por %p47, %p48
      %s51 = sadd.s32 %s50, 1
      %p54 = scmp.eq.s32.totalorder %s16, 1
      %p55 = scmp.ne.s32.totalorder %s50, %s52
      %p56 = scmp.eq.s32.totalorder %s16, 0
      %p57 = por %p55, %p56
      %p58 = scmp.ne.s32.totalorder %s50, %s52
      %p59 = scmp.eq.s32.totalorder %s21, 1
      %p60 = por %p58, %p59
      %p61 = scmp.ne.s32.totalorder %s52, %s53
      %p62 = scmp.eq.s32.totalorder %s21, 0
      %p63 = por %p61, %p62
      %p64 = scmp.ne.s32.totalorder %s52, %s53
      %p65 = scmp.eq.s32.totalorder %s22, 1
      %p66 = por %p64, %p65
      %p68 = scmp.ne.s32.totalorder %s53, %s67
      %p69 = scmp.eq.s32.totalorder %s22, 0
      %p70 = por %p68, %p69
      %s72 = sadd.s32 %s71, 1
      %p75 = scmp.eq.s32.totalorder %s16, 1
      %p76 = scmp.ne.s32.totalorder %s71, %s73
      %p77 = scmp.eq.s32.totalorder %s16, 0
      %p78 = por %p76, %p77
      %p79 = scmp.ne.s32.totalorder %s71, %s73
      %p80 = scmp.eq.s32.totalorder %s21, 1
      %p81 = por %p79, %p80
      %p82 = scmp.ne.s32.totalorder %s73, %s74
      %p83 = scmp.eq.s32.totalorder %s21, 0
      %p84 = por %p82, %p83
      %p85 = scmp.ne.s32.totalorder %s73, %s74
      %p86 = scmp.eq.s32.totalorder %s22, 1
      %p87 = por %p85, %p86
      %p89 = scmp.ne.s32.totalorder %s74, %s88
      %p90 = scmp.eq.s32.totalorder %s22, 0
      %p91 = por %p89, %p90
      %s93 = sadd.s32 %s92, 1
      %p96 = scmp.eq.s32.totalorder %s16, 1
      %p97 = scmp.ne.s32.totalorder %s92, %s94
      %p98 = scmp.eq.s32.totalorder %s16, 0
      %p99 = por %p97, %p98
      %p100 = scmp.ne.s32.totalorder %s92, %s94
      %p101 = scmp.eq.s32.totalorder %s21, 1
      %p102 = por %p100, %p101
      %p103 = scmp.ne.s32.totalorder %s94, %s95
      %p104 = scmp.eq.s32.totalorder %s21, 0
      %p105 = por %p103, %p104
      %p106 = scmp.ne.s32.totalorder %s94, %s95
      %p107 = scmp.eq.s32.totalorder %s22, 1
      %p108 = por %p106, %p107
      %p110 = scmp.ne.s32.totalorder %s95, %s109
      %p111 = scmp.eq.s32.totalorder %s22, 0
      %p112 = por %p110, %p111
      %s114 = sadd.s32 %s113, 1
      %p117 = scmp.eq.s32.totalorder %s16, 1
      %p118 = scmp.ne.s32.totalorder %s113, %s115
      %p119 = scmp.eq.s32.totalorder %s16, 0
      %p120 = por %p118, %p119
      %p121 = scmp.ne.s32.totalorder %s113, %s115
      %p122 = scmp.eq.s32.totalorder %s21, 1
      %p123 = por %p121, %p122
      %p124 = scmp.ne.s32.totalorder %s115, %s116
      %p125 = scmp.eq.s32.totalorder %s21, 0
      %p126 = por %p124, %p125
      %p127 = scmp.ne.s32.totalorder %s115, %s116
      %p128 = scmp.eq.s32.totalorder %s22, 1
      %p129 = por %p127, %p128
      %p131 = scmp.ne.s32.totalorder %s116, %s130
      %p132 = scmp.eq.s32.totalorder %s22, 0
      %p133 = por %p131, %p132
      %s135 = sadd.s32 %s134, 1
      %p138 = scmp.eq.s32.totalorder %s16, 1
      %p139 = scmp.ne.s32.totalorder %s134, %s136
      %p140 = scmp.eq.s32.totalorder %s16, 0
      %p141 = por %p139, %p140
      %p142 = scmp.ne.s32.totalorder %s134, %s136
      %p143 = scmp.eq.s32.totalorder %s21, 1
      %p144 = por %p142, %p143
      %p145 = scmp.ne.s32.totalorder %s136, %s137
      %p146 = scmp.eq.s32.totalorder %s21, 0
      %p147 = por %p145, %p146
      %p148 = scmp.ne.s32.totalorder %s136, %s137
      %p149 = scmp.eq.s32.totalorder %s22, 1
      %p150 = por %p148, %p149
      %p152 = scmp.ne.s32.totalorder %s137, %s151
      %p153 = scmp.eq.s32.totalorder %s22, 0
      %p154 = por %p152, %p153
      %s156 = sadd.s32 %s155, 1
      %p159 = scmp.eq.s32.totalorder %s16, 1
      %p160 = scmp.ne.s32.totalorder %s155, %s157
      %p161 = scmp.eq.s32.totalorder %s16, 0
      %p162 = por %p160, %p161
      %p163 = scmp.ne.s32.totalorder %s155, %s157
      %p164 = scmp.eq.s32.totalorder %s21, 1
      %p165 = por %p163, %p164
      %p166 = scmp.ne.s32.totalorder %s157, %s158
      %p167 = scmp.eq.s32.totalorder %s21, 0
      %p168 = por %p166, %p167
      %p169 = scmp.ne.s32.totalorder %s157, %s158
      %p170 = scmp.eq.s32.totalorder %s22, 1
      %p171 = por %p169, %p170
      %p173 = scmp.ne.s32.totalorder %s158, %s172
      %p174 = scmp.eq.s32.totalorder %s22, 0
      %p175 = por %p173, %p174
      %s176 = ssub.s32 %s16, %s23
      %p177 = scmp.eq.s32.totalorder %s176, 0
      %s179 = sadd.s32 %s178, 1
      %s180 = scalar_select %p177, %s178, %s179
      %p183 = pneg %p177
      %p184 = scmp.eq.s32.totalorder %s16, 1
      %p185 = por %p183, %p184
      %p186 = scmp.ne.s32.totalorder %s178, %s181
      %p187 = scmp.eq.s32.totalorder %s16, 0
      %p188 = por %p186, %p187
      %p189 = scmp.ne.s32.totalorder %s178, %s181
      %p190 = scmp.eq.s32.totalorder %s21, 1
      %p191 = por %p189, %p190
      %p192 = scmp.ne.s32.totalorder %s181, %s182
      %p193 = scmp.eq.s32.totalorder %s21, 0
      %p194 = por %p192, %p193
      %p195 = scmp.ne.s32.totalorder %s181, %s182
      %p196 = scmp.eq.s32.totalorder %s22, 1
      %p197 = por %p195, %p196
      %p199 = scmp.ne.s32.totalorder %s182, %s198
      %p200 = scmp.eq.s32.totalorder %s22, 0
      %p201 = por %p199, %p200
      %p202 = scmp.le.s32.totalorder 1, %s16
      %p203 = scmp.lt.s32.totalorder %s16, 3
      %p204 = pnand %p202, %p203
      %p205 = pneg %p204
      // Predicated region
      $region9: #{tpu_custom_call.1} parent=5 // pred_check
        _
      $region10: #{tpu_custom_call.1} parent=5 // pred_check_branch
        %207 = sbr.rel (%p204) target = $region12
      $region11: #{tpu_custom_call.1} parent=5 // pred_region
        %s208 = ssub.s32 %s16, 1
        // Predicated region
        $region13: #{tpu_custom_call.1} parent=11 // pred_check
          %p209 = pneg %p63
        $region14: #{tpu_custom_call.1} parent=11 // pred_check_branch
          %211 = sbr.rel (%p209) target = $region16
        $region15: #{tpu_custom_call.1} parent=11 // pred_region
          _
        $region16: #{tpu_custom_call.1} parent=11 // pred_fallthru
          _
        // Predicated region
        $region17: #{tpu_custom_call.1} parent=11 // pred_check
          %p212 = pneg %p84
        $region18: #{tpu_custom_call.1} parent=11 // pred_check_branch
          %214 = sbr.rel (%p212) target = $region20
        $region19: #{tpu_custom_call.1} parent=11 // pred_region
          _
        $region20: #{tpu_custom_call.1} parent=11 // pred_fallthru
          _
        // Predicated region
        $region21: #{tpu_custom_call.1} parent=11 // pred_check
          %p215 = pneg %p105
        $region22: #{tpu_custom_call.1} parent=11 // pred_check_branch
          %217 = sbr.rel (%p215) target = $region24
        $region23: #{tpu_custom_call.1} parent=11 // pred_region
          _
        $region24: #{tpu_custom_call.1} parent=11 // pred_fallthru
          _
        // Predicated region
        $region25: #{tpu_custom_call.1} parent=11 // pred_check
          %p218 = pneg %p126
        $region26: #{tpu_custom_call.1} parent=11 // pred_check_branch
          %220 = sbr.rel (%p218) target = $region28
        $region27: #{tpu_custom_call.1} parent=11 // pred_region
          _
        $region28: #{tpu_custom_call.1} parent=11 // pred_fallthru
          _
        // Predicated region
        $region29: #{tpu_custom_call.1} parent=11 // pred_check
          %p221 = pneg %p147
        $region30: #{tpu_custom_call.1} parent=11 // pred_check_branch
          %223 = sbr.rel (%p221) target = $region32
        $region31: #{tpu_custom_call.1} parent=11 // pred_region
          _
        $region32: #{tpu_custom_call.1} parent=11 // pred_fallthru
          _
        // Predicated region
        $region33: #{tpu_custom_call.1} parent=11 // pred_check
          %p224 = pneg %p168
        $region34: #{tpu_custom_call.1} parent=11 // pred_check_branch
          %226 = sbr.rel (%p224) target = $region36
        $region35: #{tpu_custom_call.1} parent=11 // pred_region
          _
        $region36: #{tpu_custom_call.1} parent=11 // pred_fallthru
          _
      $region12: #{tpu_custom_call.1} parent=5 // pred_fallthru
        _
      %p227 = scmp.lt.s32.totalorder %s16, 2
      // Predicated region
      $region37: #{tpu_custom_call.1} parent=5 // pred_check
        %p228 = pneg %p227
      $region38: #{tpu_custom_call.1} parent=5 // pred_check_branch
        %230 = sbr.rel (%p228) target = $region40
      $region39: #{tpu_custom_call.1} parent=5 // pred_region
        // Predicated region
        $region41: #{tpu_custom_call.1} parent=39 // pred_check
          %p231 = pneg %p36
        $region42: #{tpu_custom_call.1} parent=39 // pred_check_branch
          %233 = sbr.rel (%p231) target = $region44
        $region43: #{tpu_custom_call.1} parent=39 // pred_region
          %s234 = smul.u32 16, %s16
          %p235 = scmp.lt.s32.totalorder %s234, 31
          %s236 = scalar_select %p235, %s234, 31
          %s237 = smul.addr %s236, 8
          %s238 = scalar_lea.vmem %s0, %s237
          %s239 = smul.u32 16, %s16
        $region44: #{tpu_custom_call.1} parent=39 // pred_fallthru
          _
      $region40: #{tpu_custom_call.1} parent=5 // pred_fallthru
        _
      %p240 = scmp.le.s32.totalorder 1, %s16
      %p241 = scmp.lt.s32.totalorder %s16, 3
      %p242 = pnand %p240, %p241
      %p243 = pneg %p242
      // Predicated region
      $region45: #{tpu_custom_call.1} parent=5 // pred_check
        _
      $region46: #{tpu_custom_call.1} parent=5 // pred_check_branch
        %245 = sbr.rel (%p242) target = $region48
      $region47: #{tpu_custom_call.1} parent=5 // pred_region
        %s246 = ssub.s32 %s16, 1
        %s247 = smul.u32 16, %s21
        %p248 = scmp.lt.s32.totalorder %s247, 31
        %s249 = scalar_select %p248, %s247, 31
        %s250 = smul.addr %s249, 8
        %s251 = scalar_lea.vmem %s0, %s250
        %p252 = pneg %p42
        %p253 = pneg %p39
        %p254 = pneg %p63
        %p255 = pneg %p60
        %p256 = pneg %p84
        %p257 = pneg %p81
        %p258 = pneg %p105
        %p259 = pneg %p102
        %p260 = pneg %p126
        %p261 = pneg %p123
        %p262 = pneg %p147
        %p263 = pneg %p144
        %p264 = pneg %p168
        %p265 = pneg %p165
        %p266 = pneg %p194
        %p267 = pneg %p191
        %s268 = sand.u32 %s181, 1
        %s269 = scalar_lea.sflag [#allocation3], %s268
        %s270 = sand.u32 %s181, 1
        %s271 = smul.addr %s270, 128
        %s272 = scalar_lea.vmem [#allocation2], %s271
        %s273 = smul.u32 16, %s21
        %p274 = scmp.lt.s32.totalorder %s273, 31
        %s275 = scalar_select %p274, %s273, 31
        %s276 = smul.addr %s275, 8
        %s277 = scalar_lea.vmem %s0, %s276
        %s278 = smul.u32 16, %s21
        %s279 = smul.u32 16, %s21
        %v281 = vld [vmem:[%s277] sm:$0xff]
        %v282 = vld [vmem:[%s277 + $0x8] sm:$0xff]
        %v283 = vld [vmem:[%s277 + $0x10] sm:$0xff]
        %v284 = vld [vmem:[%s277 + $0x18] sm:$0xff]
        %v285 = vld [vmem:[%s277 + $0x20] sm:$0xff]
        %v286 = vld [vmem:[%s277 + $0x28] sm:$0xff]
        %v287 = vld [vmem:[%s277 + $0x30] sm:$0xff]
        %v288 = vld [vmem:[%s277 + $0x38] sm:$0xff]
        %v289 = vld [vmem:[%s277 + $0x40] sm:$0xff]
        %v290 = vld [vmem:[%s277 + $0x48] sm:$0xff]
        %v291 = vld [vmem:[%s277 + $0x50] sm:$0xff]
        %v292 = vld [vmem:[%s277 + $0x58] sm:$0xff]
        %v293 = vld [vmem:[%s277 + $0x60] sm:$0xff]
        %v294 = vld [vmem:[%s277 + $0x68] sm:$0xff]
        %v295 = vld [vmem:[%s277 + $0x70] sm:$0xff]
        %v296 = vld [vmem:[%s277 + $0x78] sm:$0xff]
        %v297 = vld [vmem:[%s1] sm:$0xf]
        %v298 = vld [vmem:[%s2] sm:$0x1]
        %300 = vset.pattern.permute.xlu0 0
        %301 = vperm.xlu0 %300, %v281
        %v302 = vpop.permute.xlu0 %301
        %305 = vset.pattern.permute.xlu0 0
        %306 = vperm.xlu0 %305, %v282
        %v307 = vpop.permute.xlu0 %306
        %310 = vset.pattern.permute.xlu0 0
        %311 = vperm.xlu0 %310, %v283
        %v312 = vpop.permute.xlu0 %311
        %315 = vset.pattern.permute.xlu0 0
        %316 = vperm.xlu0 %315, %v284
        %v317 = vpop.permute.xlu0 %316
        %320 = vset.pattern.permute.xlu0 0
        %321 = vperm.xlu0 %320, %v285
        %v322 = vpop.permute.xlu0 %321
        %325 = vset.pattern.permute.xlu0 0
        %326 = vperm.xlu0 %325, %v286
        %v327 = vpop.permute.xlu0 %326
        %330 = vset.pattern.permute.xlu0 0
        %331 = vperm.xlu0 %330, %v287
        %v332 = vpop.permute.xlu0 %331
        %335 = vset.pattern.permute.xlu0 0
        %336 = vperm.xlu0 %335, %v288
        %v337 = vpop.permute.xlu0 %336
        %340 = vset.pattern.permute.xlu0 0
        %341 = vperm.xlu0 %340, %v289
        %v342 = vpop.permute.xlu0 %341
        %345 = vset.pattern.permute.xlu0 0
        %346 = vperm.xlu0 %345, %v290
        %v347 = vpop.permute.xlu0 %346
        %350 = vset.pattern.permute.xlu0 0
        %351 = vperm.xlu0 %350, %v291
        %v352 = vpop.permute.xlu0 %351
        %355 = vset.pattern.permute.xlu0 0
        %356 = vperm.xlu0 %355, %v292
        %v357 = vpop.permute.xlu0 %356
        %360 = vset.pattern.permute.xlu0 0
        %361 = vperm.xlu0 %360, %v293
        %v362 = vpop.permute.xlu0 %361
        %365 = vset.pattern.permute.xlu0 0
        %366 = vperm.xlu0 %365, %v294
        %v367 = vpop.permute.xlu0 %366
        %370 = vset.pattern.permute.xlu0 0
        %371 = vperm.xlu0 %370, %v295
        %v372 = vpop.permute.xlu0 %371
        %375 = vset.pattern.permute.xlu0 0
        %376 = vperm.xlu0 %375, %v296
        %v377 = vpop.permute.xlu0 %376
        %v379 = vlaneseq
        %v380 = vshrl.u32 %v379, 7
        %v381 = vsub.s32 0, %v380
        %v382 = vrot.slane %v297, %v381
        %v383 = vmul.f32 %v302, %v382
        %v384 = vmul.f32 %v307, %v382
        %v385 = vmul.f32 %v312, %v382
        %v386 = vmul.f32 %v317, %v382
        %v387 = vmul.f32 %v322, %v382
        %v388 = vmul.f32 %v327, %v382
        %v389 = vmul.f32 %v332, %v382
        %v390 = vmul.f32 %v337, %v382
        %v391 = vmul.f32 %v342, %v382
        %v392 = vmul.f32 %v347, %v382
        %v393 = vmul.f32 %v352, %v382
        %v394 = vmul.f32 %v357, %v382
        %v395 = vmul.f32 %v362, %v382
        %v396 = vmul.f32 %v367, %v382
        %v397 = vmul.f32 %v372, %v382
        %v398 = vmul.f32 %v377, %v382
        %v400 = vlaneseq
        %v401 = vshrl.u32 %v400, 7
        %v402 = vsub.s32 0, %v401
        %v403 = vrot.slane %v298, %v402
        %v405 = vadd.f32 %v403, %v383
        %v406 = vadd.f32 %v403, %v384
        %v407 = vadd.f32 %v403, %v385
        %v408 = vadd.f32 %v403, %v386
        %v409 = vadd.f32 %v403, %v387
        %v410 = vadd.f32 %v403, %v388
        %v411 = vadd.f32 %v403, %v389
        %v412 = vadd.f32 %v403, %v390
        %v413 = vadd.f32 %v403, %v391
        %v414 = vadd.f32 %v403, %v392
        %v415 = vadd.f32 %v403, %v393
        %v416 = vadd.f32 %v403, %v394
        %v417 = vadd.f32 %v403, %v395
        %v418 = vadd.f32 %v403, %v396
        %v419 = vadd.f32 %v403, %v397
        %v420 = vadd.f32 %v403, %v398
        %421 = vset.pattern.permute.xlu0 1
        %422 = vperm.xlu0 %421, %v281
        %v423 = vpop.permute.xlu0 %422
        %425 = vset.pattern.permute.xlu0 1
        %426 = vperm.xlu0 %425, %v282
        %v427 = vpop.permute.xlu0 %426
        %429 = vset.pattern.permute.xlu0 1
        %430 = vperm.xlu0 %429, %v283
        %v431 = vpop.permute.xlu0 %430
        %433 = vset.pattern.permute.xlu0 1
        %434 = vperm.xlu0 %433, %v284
        %v435 = vpop.permute.xlu0 %434
        %437 = vset.pattern.permute.xlu0 1
        %438 = vperm.xlu0 %437, %v285
        %v439 = vpop.permute.xlu0 %438
        %441 = vset.pattern.permute.xlu0 1
        %442 = vperm.xlu0 %441, %v286
        %v443 = vpop.permute.xlu0 %442
        %445 = vset.pattern.permute.xlu0 1
        %446 = vperm.xlu0 %445, %v287
        %v447 = vpop.permute.xlu0 %446
        %449 = vset.pattern.permute.xlu0 1
        %450 = vperm.xlu0 %449, %v288
        %v451 = vpop.permute.xlu0 %450
        %453 = vset.pattern.permute.xlu0 1
        %454 = vperm.xlu0 %453, %v289
        %v455 = vpop.permute.xlu0 %454
        %457 = vset.pattern.permute.xlu0 1
        %458 = vperm.xlu0 %457, %v290
        %v459 = vpop.permute.xlu0 %458
        %461 = vset.pattern.permute.xlu0 1
        %462 = vperm.xlu0 %461, %v291
        %v463 = vpop.permute.xlu0 %462
        %465 = vset.pattern.permute.xlu0 1
        %466 = vperm.xlu0 %465, %v292
        %v467 = vpop.permute.xlu0 %466
        %469 = vset.pattern.permute.xlu0 1
        %470 = vperm.xlu0 %469, %v293
        %v471 = vpop.permute.xlu0 %470
        %473 = vset.pattern.permute.xlu0 1
        %474 = vperm.xlu0 %473, %v294
        %v475 = vpop.permute.xlu0 %474
        %477 = vset.pattern.permute.xlu0 1
        %478 = vperm.xlu0 %477, %v295
        %v479 = vpop.permute.xlu0 %478
        %481 = vset.pattern.permute.xlu0 1
        %482 = vperm.xlu0 %481, %v296
        %v483 = vpop.permute.xlu0 %482
        %v485 = vlaneseq
        %v486 = vshrl.u32 %v485, 7
        %v487 = vsub.s32 1, %v486
        %v488 = vrot.slane %v297, %v487
        %v489 = vmul.f32 %v423, %v488
        %v490 = vmul.f32 %v427, %v488
        %v491 = vmul.f32 %v431, %v488
        %v492 = vmul.f32 %v435, %v488
        %v493 = vmul.f32 %v439, %v488
        %v494 = vmul.f32 %v443, %v488
        %v495 = vmul.f32 %v447, %v488
        %v496 = vmul.f32 %v451, %v488
        %v497 = vmul.f32 %v455, %v488
        %v498 = vmul.f32 %v459, %v488
        %v499 = vmul.f32 %v463, %v488
        %v500 = vmul.f32 %v467, %v488
        %v501 = vmul.f32 %v471, %v488
        %v502 = vmul.f32 %v475, %v488
        %v503 = vmul.f32 %v479, %v488
        %v504 = vmul.f32 %v483, %v488
        %v505 = vadd.f32 %v405, %v489
        %v506 = vadd.f32 %v406, %v490
        %v507 = vadd.f32 %v407, %v491
        %v508 = vadd.f32 %v408, %v492
        %v509 = vadd.f32 %v409, %v493
        %v510 = vadd.f32 %v410, %v494
        %v511 = vadd.f32 %v411, %v495
        %v512 = vadd.f32 %v412, %v496
        %v513 = vadd.f32 %v413, %v497
        %v514 = vadd.f32 %v414, %v498
        %v515 = vadd.f32 %v415, %v499
        %v516 = vadd.f32 %v416, %v500
        %v517 = vadd.f32 %v417, %v501
        %v518 = vadd.f32 %v418, %v502
        %v519 = vadd.f32 %v419, %v503
        %v520 = vadd.f32 %v420, %v504
        %521 = vset.pattern.permute.xlu0 2
        %522 = vperm.xlu0 %521, %v281
        %v523 = vpop.permute.xlu0 %522
        %525 = vset.pattern.permute.xlu0 2
        %526 = vperm.xlu0 %525, %v282
        %v527 = vpop.permute.xlu0 %526
        %529 = vset.pattern.permute.xlu0 2
        %530 = vperm.xlu0 %529, %v283
        %v531 = vpop.permute.xlu0 %530
        %533 = vset.pattern.permute.xlu0 2
        %534 = vperm.xlu0 %533, %v284
        %v535 = vpop.permute.xlu0 %534
        %537 = vset.pattern.permute.xlu0 2
        %538 = vperm.xlu0 %537, %v285
        %v539 = vpop.permute.xlu0 %538
        %541 = vset.pattern.permute.xlu0 2
        %542 = vperm.xlu0 %541, %v286
        %v543 = vpop.permute.xlu0 %542
        %545 = vset.pattern.permute.xlu0 2
        %546 = vperm.xlu0 %545, %v287
        %v547 = vpop.permute.xlu0 %546
        %549 = vset.pattern.permute.xlu0 2
        %550 = vperm.xlu0 %549, %v288
        %v551 = vpop.permute.xlu0 %550
        %553 = vset.pattern.permute.xlu0 2
        %554 = vperm.xlu0 %553, %v289
        %v555 = vpop.permute.xlu0 %554
        %557 = vset.pattern.permute.xlu0 2
        %558 = vperm.xlu0 %557, %v290
        %v559 = vpop.permute.xlu0 %558
        %561 = vset.pattern.permute.xlu0 2
        %562 = vperm.xlu0 %561, %v291
        %v563 = vpop.permute.xlu0 %562
        %565 = vset.pattern.permute.xlu0 2
        %566 = vperm.xlu0 %565, %v292
        %v567 = vpop.permute.xlu0 %566
        %569 = vset.pattern.permute.xlu0 2
        %570 = vperm.xlu0 %569, %v293
        %v571 = vpop.permute.xlu0 %570
        %573 = vset.pattern.permute.xlu0 2
        %574 = vperm.xlu0 %573, %v294
        %v575 = vpop.permute.xlu0 %574
        %577 = vset.pattern.permute.xlu0 2
        %578 = vperm.xlu0 %577, %v295
        %v579 = vpop.permute.xlu0 %578
        %581 = vset.pattern.permute.xlu0 2
        %582 = vperm.xlu0 %581, %v296
        %v583 = vpop.permute.xlu0 %582
        %v585 = vlaneseq
        %v586 = vshrl.u32 %v585, 7
        %v587 = vsub.s32 2, %v586
        %v588 = vrot.slane %v297, %v587
        %v589 = vmul.f32 %v523, %v588
        %v590 = vmul.f32 %v527, %v588
        %v591 = vmul.f32 %v531, %v588
        %v592 = vmul.f32 %v535, %v588
        %v593 = vmul.f32 %v539, %v588
        %v594 = vmul.f32 %v543, %v588
        %v595 = vmul.f32 %v547, %v588
        %v596 = vmul.f32 %v551, %v588
        %v597 = vmul.f32 %v555, %v588
        %v598 = vmul.f32 %v559, %v588
        %v599 = vmul.f32 %v563, %v588
        %v600 = vmul.f32 %v567, %v588
        %v601 = vmul.f32 %v571, %v588
        %v602 = vmul.f32 %v575, %v588
        %v603 = vmul.f32 %v579, %v588
        %v604 = vmul.f32 %v583, %v588
        %v605 = vadd.f32 %v505, %v589
        %v606 = vadd.f32 %v506, %v590
        %v607 = vadd.f32 %v507, %v591
        %v608 = vadd.f32 %v508, %v592
        %v609 = vadd.f32 %v509, %v593
        %v610 = vadd.f32 %v510, %v594
        %v611 = vadd.f32 %v511, %v595
        %v612 = vadd.f32 %v512, %v596
        %v613 = vadd.f32 %v513, %v597
        %v614 = vadd.f32 %v514, %v598
        %v615 = vadd.f32 %v515, %v599
        %v616 = vadd.f32 %v516, %v600
        %v617 = vadd.f32 %v517, %v601
        %v618 = vadd.f32 %v518, %v602
        %v619 = vadd.f32 %v519, %v603
        %v620 = vadd.f32 %v520, %v604
        %621 = vset.pattern.permute.xlu0 3
        %622 = vperm.xlu0 %621, %v281
        %v623 = vpop.permute.xlu0 %622
        %625 = vset.pattern.permute.xlu0 3
        %626 = vperm.xlu0 %625, %v282
        %v627 = vpop.permute.xlu0 %626
        %629 = vset.pattern.permute.xlu0 3
        %630 = vperm.xlu0 %629, %v283
        %v631 = vpop.permute.xlu0 %630
        %633 = vset.pattern.permute.xlu0 3
        %634 = vperm.xlu0 %633, %v284
        %v635 = vpop.permute.xlu0 %634
        %637 = vset.pattern.permute.xlu0 3
        %638 = vperm.xlu0 %637, %v285
        %v639 = vpop.permute.xlu0 %638
        %641 = vset.pattern.permute.xlu0 3
        %642 = vperm.xlu0 %641, %v286
        %v643 = vpop.permute.xlu0 %642
        %645 = vset.pattern.permute.xlu0 3
        %646 = vperm.xlu0 %645, %v287
        %v647 = vpop.permute.xlu0 %646
        %649 = vset.pattern.permute.xlu0 3
        %650 = vperm.xlu0 %649, %v288
        %v651 = vpop.permute.xlu0 %650
        %653 = vset.pattern.permute.xlu0 3
        %654 = vperm.xlu0 %653, %v289
        %v655 = vpop.permute.xlu0 %654
        %657 = vset.pattern.permute.xlu0 3
        %658 = vperm.xlu0 %657, %v290
        %v659 = vpop.permute.xlu0 %658
        %661 = vset.pattern.permute.xlu0 3
        %662 = vperm.xlu0 %661, %v291
        %v663 = vpop.permute.xlu0 %662
        %665 = vset.pattern.permute.xlu0 3
        %666 = vperm.xlu0 %665, %v292
        %v667 = vpop.permute.xlu0 %666
        %669 = vset.pattern.permute.xlu0 3
        %670 = vperm.xlu0 %669, %v293
        %v671 = vpop.permute.xlu0 %670
        %673 = vset.pattern.permute.xlu0 3
        %674 = vperm.xlu0 %673, %v294
        %v675 = vpop.permute.xlu0 %674
        %677 = vset.pattern.permute.xlu0 3
        %678 = vperm.xlu0 %677, %v295
        %v679 = vpop.permute.xlu0 %678
        %681 = vset.pattern.permute.xlu0 3
        %682 = vperm.xlu0 %681, %v296
        %v683 = vpop.permute.xlu0 %682
        %v685 = vlaneseq
        %v686 = vshrl.u32 %v685, 7
        %v687 = vsub.s32 3, %v686
        %v688 = vrot.slane %v297, %v687
        %v689 = vmul.f32 %v623, %v688
        %v690 = vmul.f32 %v627, %v688
        %v691 = vmul.f32 %v631, %v688
        %v692 = vmul.f32 %v635, %v688
        %v693 = vmul.f32 %v639, %v688
        %v694 = vmul.f32 %v643, %v688
        %v695 = vmul.f32 %v647, %v688
        %v696 = vmul.f32 %v651, %v688
        %v697 = vmul.f32 %v655, %v688
        %v698 = vmul.f32 %v659, %v688
        %v699 = vmul.f32 %v663, %v688
        %v700 = vmul.f32 %v667, %v688
        %v701 = vmul.f32 %v671, %v688
        %v702 = vmul.f32 %v675, %v688
        %v703 = vmul.f32 %v679, %v688
        %v704 = vmul.f32 %v683, %v688
        %v705 = vadd.f32 %v605, %v689
        %v706 = vadd.f32 %v606, %v690
        %v707 = vadd.f32 %v607, %v691
        %v708 = vadd.f32 %v608, %v692
        %v709 = vadd.f32 %v609, %v693
        %v710 = vadd.f32 %v610, %v694
        %v711 = vadd.f32 %v611, %v695
        %v712 = vadd.f32 %v612, %v696
        %v713 = vadd.f32 %v613, %v697
        %v714 = vadd.f32 %v614, %v698
        %v715 = vadd.f32 %v615, %v699
        %v716 = vadd.f32 %v616, %v700
        %v717 = vadd.f32 %v617, %v701
        %v718 = vadd.f32 %v618, %v702
        %v719 = vadd.f32 %v619, %v703
        %v720 = vadd.f32 %v620, %v704
        %v721 = vmax.f32 %v705, 0.0
        %v722 = vmax.f32 %v706, 0.0
        %v723 = vmax.f32 %v707, 0.0
        %v724 = vmax.f32 %v708, 0.0
        %v725 = vmax.f32 %v709, 0.0
        %v726 = vmax.f32 %v710, 0.0
        %v727 = vmax.f32 %v711, 0.0
        %v728 = vmax.f32 %v712, 0.0
        %v729 = vmax.f32 %v713, 0.0
        %v730 = vmax.f32 %v714, 0.0
        %v731 = vmax.f32 %v715, 0.0
        %v732 = vmax.f32 %v716, 0.0
        %v733 = vmax.f32 %v717, 0.0
        %v734 = vmax.f32 %v718, 0.0
        %v735 = vmax.f32 %v719, 0.0
        %v736 = vmax.f32 %v720, 0.0
        %v737 = vpack.c.bf16 %v722, %v721
        %v738 = vpack.c.bf16 %v724, %v723
        %v739 = vpack.c.bf16 %v726, %v725
        %v740 = vpack.c.bf16 %v728, %v727
        %v741 = vpack.c.bf16 %v730, %v729
        %v742 = vpack.c.bf16 %v732, %v731
        %v743 = vpack.c.bf16 %v734, %v733
        %v744 = vpack.c.bf16 %v736, %v735
        %v745 = vld [vmem:[%s3] sm:$0xf]
        %v746 = vld [vmem:[%s3 + $0x4] sm:$0xf]
        %v747 = vld [vmem:[%s3 + $0x8] sm:$0xf]
        %v748 = vld [vmem:[%s3 + $0xc] sm:$0xf]
        %v749 = vld [vmem:[%s3 + $0x10] sm:$0xf]
        %v750 = vld [vmem:[%s3 + $0x14] sm:$0xf]
        %v751 = vld [vmem:[%s3 + $0x18] sm:$0xf]
        %v752 = vld [vmem:[%s3 + $0x1c] sm:$0xf]
        %v753 = vld [vmem:[%s3 + $0x20] sm:$0xf]
        %v754 = vld [vmem:[%s3 + $0x24] sm:$0xf]
        %v755 = vld [vmem:[%s3 + $0x28] sm:$0xf]
        %v756 = vld [vmem:[%s3 + $0x2c] sm:$0xf]
        %v757 = vld [vmem:[%s3 + $0x30] sm:$0xf]
        %v758 = vld [vmem:[%s3 + $0x34] sm:$0xf]
        %v759 = vld [vmem:[%s3 + $0x38] sm:$0xf]
        %v760 = vld [vmem:[%s3 + $0x3c] sm:$0xf]
        %v761 = vld [vmem:[%s4] sm:$0x1]
        %v763 = vlaneseq
        %v764 = vshrl.u32 %v763, 7
        %v765 = vsub.s32 0, %v764
        %v766 = vrot.slane %v761, %v765
        %v784 = vunpack.c.l.b16 %v745
        %v785 = vunpack.c.l.b16 %v746
        %v786 = vunpack.c.l.b16 %v747
        %v787 = vunpack.c.l.b16 %v748
        %v788 = vunpack.c.l.b16 %v749
        %v789 = vunpack.c.l.b16 %v750
        %v790 = vunpack.c.l.b16 %v751
        %v791 = vunpack.c.l.b16 %v752
        %v792 = vunpack.c.l.b16 %v753
        %v793 = vunpack.c.l.b16 %v754
        %v794 = vunpack.c.l.b16 %v755
        %v795 = vunpack.c.l.b16 %v756
        %v796 = vunpack.c.l.b16 %v757
        %v797 = vunpack.c.l.b16 %v758
        %v798 = vunpack.c.l.b16 %v759
        %v799 = vunpack.c.l.b16 %v760
        %v800 = vpack.c.b16 %v785, %v784
        %v801 = vpack.c.b16 %v787, %v786
        %v802 = vpack.c.b16 %v789, %v788
        %v803 = vpack.c.b16 %v791, %v790
        %v804 = vpack.c.b16 %v793, %v792
        %v805 = vpack.c.b16 %v795, %v794
        %v806 = vpack.c.b16 %v797, %v796
        %v807 = vpack.c.b16 %v799, %v798
        %816 = vmatprep.subr.bf16.mxu0 0
        %817 = vmatpush1.bf16.msra.mxu0 %v800
        %818 = vmatprep.subr.bf16.mxu0 0
        %819 = vmatpush1.bf16.msra.mxu0 %v801
        %820 = vmatprep.subr.bf16.mxu0 0
        %821 = vmatpush1.bf16.msra.mxu0 %v802
        %822 = vmatprep.subr.bf16.mxu0 0
        %823 = vmatpush1.bf16.msra.mxu0 %v803
        %824 = vmatprep.subr.bf16.mxu0 0
        %825 = vmatpush1.bf16.msra.mxu0 %v804
        %826 = vmatprep.subr.bf16.mxu0 0
        %827 = vmatpush1.bf16.msra.mxu0 %v805
        %828 = vmatprep.subr.bf16.mxu0 0
        %829 = vmatpush1.bf16.msra.mxu0 %v806
        %830 = vmatprep.subr.bf16.mxu0 0
        %831 = vmatpush1.bf16.msra.mxu0 %v807
        %832 = vmatprep.subr.bf16.mxu0 0
        %833 = vmatpush1.bf16.msra.mxu0 0
        %834 = vmatprep.subr.bf16.mxu0 0
        %835 = vmatpush1.bf16.msra.mxu0 0
        %836 = vmatprep.subr.bf16.mxu0 0
        %837 = vmatpush1.bf16.msra.mxu0 0
        %838 = vmatprep.subr.bf16.mxu0 0
        %839 = vmatpush1.bf16.msra.mxu0 0
        %840 = vmatprep.subr.bf16.mxu0 0
        %841 = vmatpush1.bf16.msra.mxu0 0
        %842 = vmatprep.subr.bf16.mxu0 0
        %843 = vmatpush1.bf16.msra.mxu0 0
        %844 = vmatprep.subr.bf16.mxu0 0
        %845 = vmatpush1.bf16.msra.mxu0 0
        %846 = vmatprep.subr.bf16.mxu0 0
        %847 = vmatpush1.bf16.msra.mxu0 0
        %848 = vmatprep.mubr.bf16.mxu0 0
        %849 = vmatmul.mubr.bf16.gmra.mrb[0].mxu0 %v737
        %v850 = vpop.f32.mrb[0].mxu0
        %v851 = vadd.f32 %v766, %v850
        %v852 = vpop.f32.mrb[0].mxu0
        %v853 = vpop.f32.mrb[0].mxu0
        %v854 = vadd.f32 %v766, %v853
        %v855 = vpop.f32.mrb[0].mxu0
        %856 = vmatprep.mubr.bf16.mxu0 0
        %857 = vmatmul.mubr.bf16.gmra.mrb[0].mxu0 %v738
        %v858 = vpop.f32.mrb[0].mxu0
        %v859 = vadd.f32 %v766, %v858
        %v860 = vpop.f32.mrb[0].mxu0
        %v861 = vpop.f32.mrb[0].mxu0
        %v862 = vadd.f32 %v766, %v861
        %v863 = vpop.f32.mrb[0].mxu0
        %864 = vmatprep.mubr.bf16.mxu0 0
        %865 = vmatmul.mubr.bf16.gmra.mrb[0].mxu0 %v739
        %v866 = vpop.f32.mrb[0].mxu0
        %v867 = vadd.f32 %v766, %v866
        %v868 = vpop.f32.mrb[0].mxu0
        %v869 = vpop.f32.mrb[0].mxu0
        %v870 = vadd.f32 %v766, %v869
        %v871 = vpop.f32.mrb[0].mxu0
        %872 = vmatprep.mubr.bf16.mxu0 0
        %873 = vmatmul.mubr.bf16.gmra.mrb[0].mxu0 %v740
        %v874 = vpop.f32.mrb[0].mxu0
        %v875 = vadd.f32 %v766, %v874
        %v876 = vpop.f32.mrb[0].mxu0
        %v877 = vpop.f32.mrb[0].mxu0
        %v878 = vadd.f32 %v766, %v877
        %v879 = vpop.f32.mrb[0].mxu0
        %880 = vmatprep.mubr.bf16.mxu0 0
        %881 = vmatmul.mubr.bf16.gmra.mrb[0].mxu0 %v741
        %v882 = vpop.f32.mrb[0].mxu0
        %v883 = vadd.f32 %v766, %v882
        %v884 = vpop.f32.mrb[0].mxu0
        %v885 = vpop.f32.mrb[0].mxu0
        %v886 = vadd.f32 %v766, %v885
        %v887 = vpop.f32.mrb[0].mxu0
        %888 = vmatprep.mubr.bf16.mxu0 0
        %889 = vmatmul.mubr.bf16.gmra.mrb[0].mxu0 %v742
        %v890 = vpop.f32.mrb[0].mxu0
        %v891 = vadd.f32 %v766, %v890
        %v892 = vpop.f32.mrb[0].mxu0
        %v893 = vpop.f32.mrb[0].mxu0
        %v894 = vadd.f32 %v766, %v893
        %v895 = vpop.f32.mrb[0].mxu0
        %896 = vmatprep.mubr.bf16.mxu0 0
        %897 = vmatmul.mubr.bf16.gmra.mrb[0].mxu0 %v743
        %v898 = vpop.f32.mrb[0].mxu0
        %v899 = vadd.f32 %v766, %v898
        %v900 = vpop.f32.mrb[0].mxu0
        %v901 = vpop.f32.mrb[0].mxu0
        %v902 = vadd.f32 %v766, %v901
        %v903 = vpop.f32.mrb[0].mxu0
        %904 = vmatprep.mubr.bf16.mxu0 0
        %905 = vmatmul.mubr.bf16.gmra.mrb[0].mxu0 %v744
        %v906 = vpop.f32.mrb[0].mxu0
        %v907 = vadd.f32 %v766, %v906
        %v908 = vpop.f32.mrb[0].mxu0
        %v909 = vpop.f32.mrb[0].mxu0
        %v910 = vadd.f32 %v766, %v909
        %v911 = vpop.f32.mrb[0].mxu0
        %912 = vdwg.mxu0
        %v913 = vmax.f32 %v851, 0.0
        %v914 = vmax.f32 %v854, 0.0
        %v915 = vmax.f32 %v859, 0.0
        %v916 = vmax.f32 %v862, 0.0
        %v917 = vmax.f32 %v867, 0.0
        %v918 = vmax.f32 %v870, 0.0
        %v919 = vmax.f32 %v875, 0.0
        %v920 = vmax.f32 %v878, 0.0
        %v921 = vmax.f32 %v883, 0.0
        %v922 = vmax.f32 %v886, 0.0
        %v923 = vmax.f32 %v891, 0.0
        %v924 = vmax.f32 %v894, 0.0
        %v925 = vmax.f32 %v899, 0.0
        %v926 = vmax.f32 %v902, 0.0
        %v927 = vmax.f32 %v907, 0.0
        %v928 = vmax.f32 %v910, 0.0
        %v929 = vpack.c.bf16 %v914, %v913
        %v930 = vpack.c.bf16 %v916, %v915
        %v931 = vpack.c.bf16 %v918, %v917
        %v932 = vpack.c.bf16 %v920, %v919
        %v933 = vpack.c.bf16 %v922, %v921
        %v934 = vpack.c.bf16 %v924, %v923
        %v935 = vpack.c.bf16 %v926, %v925
        %v936 = vpack.c.bf16 %v928, %v927
        %v937 = vld [vmem:[%s5] sm:$0xf]
        %v938 = vld [vmem:[%s5 + $0x4] sm:$0xf]
        %v939 = vld [vmem:[%s5 + $0x8] sm:$0xf]
        %v940 = vld [vmem:[%s5 + $0xc] sm:$0xf]
        %v941 = vld [vmem:[%s5 + $0x10] sm:$0xf]
        %v942 = vld [vmem:[%s5 + $0x14] sm:$0xf]
        %v943 = vld [vmem:[%s5 + $0x18] sm:$0xf]
        %v944 = vld [vmem:[%s5 + $0x1c] sm:$0xf]
        %v945 = vld [vmem:[%s5 + $0x20] sm:$0xf]
        %v946 = vld [vmem:[%s5 + $0x24] sm:$0xf]
        %v947 = vld [vmem:[%s5 + $0x28] sm:$0xf]
        %v948 = vld [vmem:[%s5 + $0x2c] sm:$0xf]
        %v949 = vld [vmem:[%s5 + $0x30] sm:$0xf]
        %v950 = vld [vmem:[%s5 + $0x34] sm:$0xf]
        %v951 = vld [vmem:[%s5 + $0x38] sm:$0xf]
        %v952 = vld [vmem:[%s5 + $0x3c] sm:$0xf]
        %v953 = vld [vmem:[%s6] sm:$0x1]
        %v955 = vlaneseq
        %v956 = vshrl.u32 %v955, 7
        %v957 = vsub.s32 0, %v956
        %v958 = vrot.slane %v953, %v957
        %v976 = vunpack.c.l.b16 %v937
        %v977 = vunpack.c.l.b16 %v938
        %v978 = vunpack.c.l.b16 %v939
        %v979 = vunpack.c.l.b16 %v940
        %v980 = vunpack.c.l.b16 %v941
        %v981 = vunpack.c.l.b16 %v942
        %v982 = vunpack.c.l.b16 %v943
        %v983 = vunpack.c.l.b16 %v944
        %v984 = vunpack.c.l.b16 %v945
        %v985 = vunpack.c.l.b16 %v946
        %v986 = vunpack.c.l.b16 %v947
        %v987 = vunpack.c.l.b16 %v948
        %v988 = vunpack.c.l.b16 %v949
        %v989 = vunpack.c.l.b16 %v950
        %v990 = vunpack.c.l.b16 %v951
        %v991 = vunpack.c.l.b16 %v952
        %v992 = vpack.c.b16 %v977, %v976
        %v993 = vpack.c.b16 %v979, %v978
        %v994 = vpack.c.b16 %v981, %v980
        %v995 = vpack.c.b16 %v983, %v982
        %v996 = vpack.c.b16 %v985, %v984
        %v997 = vpack.c.b16 %v987, %v986
        %v998 = vpack.c.b16 %v989, %v988
        %v999 = vpack.c.b16 %v991, %v990
        %1008 = vmatprep.subr.bf16.mxu0 0
        %1009 = vmatpush1.bf16.msra.mxu0 %v992
        %1010 = vmatprep.subr.bf16.mxu0 0
        %1011 = vmatpush1.bf16.msra.mxu0 %v993
        %1012 = vmatprep.subr.bf16.mxu0 0
        %1013 = vmatpush1.bf16.msra.mxu0 %v994
        %1014 = vmatprep.subr.bf16.mxu0 0
        %1015 = vmatpush1.bf16.msra.mxu0 %v995
        %1016 = vmatprep.subr.bf16.mxu0 0
        %1017 = vmatpush1.bf16.msra.mxu0 %v996
        %1018 = vmatprep.subr.bf16.mxu0 0
        %1019 = vmatpush1.bf16.msra.mxu0 %v997
        %1020 = vmatprep.subr.bf16.mxu0 0
        %1021 = vmatpush1.bf16.msra.mxu0 %v998
        %1022 = vmatprep.subr.bf16.mxu0 0
        %1023 = vmatpush1.bf16.msra.mxu0 %v999
        %1024 = vmatprep.subr.bf16.mxu0 0
        %1025 = vmatpush1.bf16.msra.mxu0 0
        %1026 = vmatprep.subr.bf16.mxu0 0
        %1027 = vmatpush1.bf16.msra.mxu0 0
        %1028 = vmatprep.subr.bf16.mxu0 0
        %1029 = vmatpush1.bf16.msra.mxu0 0
        %1030 = vmatprep.subr.bf16.mxu0 0
        %1031 = vmatpush1.bf16.msra.mxu0 0
        %1032 = vmatprep.subr.bf16.mxu0 0
        %1033 = vmatpush1.bf16.msra.mxu0 0
        %1034 = vmatprep.subr.bf16.mxu0 0
        %1035 = vmatpush1.bf16.msra.mxu0 0
        %1036 = vmatprep.subr.bf16.mxu0 0
        %1037 = vmatpush1.bf16.msra.mxu0 0
        %1038 = vmatprep.subr.bf16.mxu0 0
        %1039 = vmatpush1.bf16.msra.mxu0 0
        %1040 = vmatprep.mubr.bf16.mxu0 0
        %1041 = vmatmul.mubr.bf16.gmra.mrb[0].mxu0 %v929
        %v1042 = vpop.f32.mrb[0].mxu0
        %v1043 = vadd.f32 %v958, %v1042
        %v1044 = vpop.f32.mrb[0].mxu0
        %v1045 = vpop.f32.mrb[0].mxu0
        %v1046 = vadd.f32 %v958, %v1045
        %v1047 = vpop.f32.mrb[0].mxu0
        %1048 = vmatprep.mubr.bf16.mxu0 0
        %1049 = vmatmul.mubr.bf16.gmra.mrb[0].mxu0 %v930
        %v1050 = vpop.f32.mrb[0].mxu0
        %v1051 = vadd.f32 %v958, %v1050
        %v1052 = vpop.f32.mrb[0].mxu0
        %v1053 = vpop.f32.mrb[0].mxu0
        %v1054 = vadd.f32 %v958, %v1053
        %v1055 = vpop.f32.mrb[0].mxu0
        %1056 = vmatprep.mubr.bf16.mxu0 0
        %1057 = vmatmul.mubr.bf16.gmra.mrb[0].mxu0 %v931
        %v1058 = vpop.f32.mrb[0].mxu0
        %v1059 = vadd.f32 %v958, %v1058
        %v1060 = vpop.f32.mrb[0].mxu0
        %v1061 = vpop.f32.mrb[0].mxu0
        %v1062 = vadd.f32 %v958, %v1061
        %v1063 = vpop.f32.mrb[0].mxu0
        %1064 = vmatprep.mubr.bf16.mxu0 0
        %1065 = vmatmul.mubr.bf16.gmra.mrb[0].mxu0 %v932
        %v1066 = vpop.f32.mrb[0].mxu0
        %v1067 = vadd.f32 %v958, %v1066
        %v1068 = vpop.f32.mrb[0].mxu0
        %v1069 = vpop.f32.mrb[0].mxu0
        %v1070 = vadd.f32 %v958, %v1069
        %v1071 = vpop.f32.mrb[0].mxu0
        %1072 = vmatprep.mubr.bf16.mxu0 0
        %1073 = vmatmul.mubr.bf16.gmra.mrb[0].mxu0 %v933
        %v1074 = vpop.f32.mrb[0].mxu0
        %v1075 = vadd.f32 %v958, %v1074
        %v1076 = vpop.f32.mrb[0].mxu0
        %v1077 = vpop.f32.mrb[0].mxu0
        %v1078 = vadd.f32 %v958, %v1077
        %v1079 = vpop.f32.mrb[0].mxu0
        %1080 = vmatprep.mubr.bf16.mxu0 0
        %1081 = vmatmul.mubr.bf16.gmra.mrb[0].mxu0 %v934
        %v1082 = vpop.f32.mrb[0].mxu0
        %v1083 = vadd.f32 %v958, %v1082
        %v1084 = vpop.f32.mrb[0].mxu0
        %v1085 = vpop.f32.mrb[0].mxu0
        %v1086 = vadd.f32 %v958, %v1085
        %v1087 = vpop.f32.mrb[0].mxu0
        %1088 = vmatprep.mubr.bf16.mxu0 0
        %1089 = vmatmul.mubr.bf16.gmra.mrb[0].mxu0 %v935
        %v1090 = vpop.f32.mrb[0].mxu0
        %v1091 = vadd.f32 %v958, %v1090
        %v1092 = vpop.f32.mrb[0].mxu0
        %v1093 = vpop.f32.mrb[0].mxu0
        %v1094 = vadd.f32 %v958, %v1093
        %v1095 = vpop.f32.mrb[0].mxu0
        %1096 = vmatprep.mubr.bf16.mxu0 0
        %1097 = vmatmul.mubr.bf16.gmra.mrb[0].mxu0 %v936
        %v1098 = vpop.f32.mrb[0].mxu0
        %v1099 = vadd.f32 %v958, %v1098
        %v1100 = vpop.f32.mrb[0].mxu0
        %v1101 = vpop.f32.mrb[0].mxu0
        %v1102 = vadd.f32 %v958, %v1101
        %v1103 = vpop.f32.mrb[0].mxu0
        %1104 = vdwg.mxu0
        %1105 = vmax.xlane.f32.xlu0 %v1043
        %v1106 = vpop.xlane.xlu0 %1105
        %1107 = vmax.xlane.f32.xlu0 %v1046
        %v1108 = vpop.xlane.xlu0 %1107
        %1109 = vmax.xlane.f32.xlu0 %v1051
        %v1110 = vpop.xlane.xlu0 %1109
        %1111 = vmax.xlane.f32.xlu0 %v1054
        %v1112 = vpop.xlane.xlu0 %1111
        %1113 = vmax.xlane.f32.xlu0 %v1059
        %v1114 = vpop.xlane.xlu0 %1113
        %1115 = vmax.xlane.f32.xlu0 %v1062
        %v1116 = vpop.xlane.xlu0 %1115
        %1117 = vmax.xlane.f32.xlu0 %v1067
        %v1118 = vpop.xlane.xlu0 %1117
        %1119 = vmax.xlane.f32.xlu0 %v1070
        %v1120 = vpop.xlane.xlu0 %1119
        %1121 = vmax.xlane.f32.xlu0 %v1075
        %v1122 = vpop.xlane.xlu0 %1121
        %1123 = vmax.xlane.f32.xlu0 %v1078
        %v1124 = vpop.xlane.xlu0 %1123
        %1125 = vmax.xlane.f32.xlu0 %v1083
        %v1126 = vpop.xlane.xlu0 %1125
        %1127 = vmax.xlane.f32.xlu0 %v1086
        %v1128 = vpop.xlane.xlu0 %1127
        %1129 = vmax.xlane.f32.xlu0 %v1091
        %v1130 = vpop.xlane.xlu0 %1129
        %1131 = vmax.xlane.f32.xlu0 %v1094
        %v1132 = vpop.xlane.xlu0 %1131
        %1133 = vmax.xlane.f32.xlu0 %v1099
        %v1134 = vpop.xlane.xlu0 %1133
        %1135 = vmax.xlane.f32.xlu0 %v1102
        %v1136 = vpop.xlane.xlu0 %1135
        %v1137 = vsub.f32 %v1043, %v1106
        %v1138 = vsub.f32 %v1046, %v1108
        %v1139 = vsub.f32 %v1051, %v1110
        %v1140 = vsub.f32 %v1054, %v1112
        %v1141 = vsub.f32 %v1059, %v1114
        %v1142 = vsub.f32 %v1062, %v1116
        %v1143 = vsub.f32 %v1067, %v1118
        %v1144 = vsub.f32 %v1070, %v1120
        %v1145 = vsub.f32 %v1075, %v1122
        %v1146 = vsub.f32 %v1078, %v1124
        %v1147 = vsub.f32 %v1083, %v1126
        %v1148 = vsub.f32 %v1086, %v1128
        %v1149 = vsub.f32 %v1091, %v1130
        %v1150 = vsub.f32 %v1094, %v1132
        %v1151 = vsub.f32 %v1099, %v1134
        %v1152 = vsub.f32 %v1102, %v1136
        %v1153 = vmul.f32 %v1137, 1.442695
        %v1154 = vpow.pop %v1153
        %v1155 = vmul.f32 %v1138, 1.442695
        %v1156 = vpow.pop %v1155
        %v1157 = vmul.f32 %v1139, 1.442695
        %v1158 = vpow.pop %v1157
        %v1159 = vmul.f32 %v1140, 1.442695
        %v1160 = vpow.pop %v1159
        %v1161 = vmul.f32 %v1141, 1.442695
        %v1162 = vpow.pop %v1161
        %v1163 = vmul.f32 %v1142, 1.442695
        %v1164 = vpow.pop %v1163
        %v1165 = vmul.f32 %v1143, 1.442695
        %v1166 = vpow.pop %v1165
        %v1167 = vmul.f32 %v1144, 1.442695
        %v1168 = vpow.pop %v1167
        %v1169 = vmul.f32 %v1145, 1.442695
        %v1170 = vpow.pop %v1169
        %v1171 = vmul.f32 %v1146, 1.442695
        %v1172 = vpow.pop %v1171
        %v1173 = vmul.f32 %v1147, 1.442695
        %v1174 = vpow.pop %v1173
        %v1175 = vmul.f32 %v1148, 1.442695
        %v1176 = vpow.pop %v1175
        %v1177 = vmul.f32 %v1149, 1.442695
        %v1178 = vpow.pop %v1177
        %v1179 = vmul.f32 %v1150, 1.442695
        %v1180 = vpow.pop %v1179
        %v1181 = vmul.f32 %v1151, 1.442695
        %v1182 = vpow.pop %v1181
        %v1183 = vmul.f32 %v1152, 1.442695
        %v1184 = vpow.pop %v1183
        %1185 = vadd.xlane.f32.xlu0 %v1154
        %v1186 = vpop.xlane.xlu0 %1185
        %1187 = vadd.xlane.f32.xlu0 %v1156
        %v1188 = vpop.xlane.xlu0 %1187
        %1189 = vadd.xlane.f32.xlu0 %v1158
        %v1190 = vpop.xlane.xlu0 %1189
        %1191 = vadd.xlane.f32.xlu0 %v1160
        %v1192 = vpop.xlane.xlu0 %1191
        %1193 = vadd.xlane.f32.xlu0 %v1162
        %v1194 = vpop.xlane.xlu0 %1193
        %1195 = vadd.xlane.f32.xlu0 %v1164
        %v1196 = vpop.xlane.xlu0 %1195
        %1197 = vadd.xlane.f32.xlu0 %v1166
        %v1198 = vpop.xlane.xlu0 %1197
        %1199 = vadd.xlane.f32.xlu0 %v1168
        %v1200 = vpop.xlane.xlu0 %1199
        %1201 = vadd.xlane.f32.xlu0 %v1170
        %v1202 = vpop.xlane.xlu0 %1201
        %1203 = vadd.xlane.f32.xlu0 %v1172
        %v1204 = vpop.xlane.xlu0 %1203
        %1205 = vadd.xlane.f32.xlu0 %v1174
        %v1206 = vpop.xlane.xlu0 %1205
        %1207 = vadd.xlane.f32.xlu0 %v1176
        %v1208 = vpop.xlane.xlu0 %1207
        %1209 = vadd.xlane.f32.xlu0 %v1178
        %v1210 = vpop.xlane.xlu0 %1209
        %1211 = vadd.xlane.f32.xlu0 %v1180
        %v1212 = vpop.xlane.xlu0 %1211
        %1213 = vadd.xlane.f32.xlu0 %v1182
        %v1214 = vpop.xlane.xlu0 %1213
        %1215 = vadd.xlane.f32.xlu0 %v1184
        %v1216 = vpop.xlane.xlu0 %1215
        %v1217 = vrcp.pop %v1186
        %v1218 = vmul.f32 %v1154, %v1217
        %v1219 = vrcp.pop %v1188
        %v1220 = vmul.f32 %v1156, %v1219
        %v1221 = vrcp.pop %v1190
        %v1222 = vmul.f32 %v1158, %v1221
        %v1223 = vrcp.pop %v1192
        %v1224 = vmul.f32 %v1160, %v1223
        %v1225 = vrcp.pop %v1194
        %v1226 = vmul.f32 %v1162, %v1225
        %v1227 = vrcp.pop %v1196
        %v1228 = vmul.f32 %v1164, %v1227
        %v1229 = vrcp.pop %v1198
        %v1230 = vmul.f32 %v1166, %v1229
        %v1231 = vrcp.pop %v1200
        %v1232 = vmul.f32 %v1168, %v1231
        %v1233 = vrcp.pop %v1202
        %v1234 = vmul.f32 %v1170, %v1233
        %v1235 = vrcp.pop %v1204
        %v1236 = vmul.f32 %v1172, %v1235
        %v1237 = vrcp.pop %v1206
        %v1238 = vmul.f32 %v1174, %v1237
        %v1239 = vrcp.pop %v1208
        %v1240 = vmul.f32 %v1176, %v1239
        %v1241 = vrcp.pop %v1210
        %v1242 = vmul.f32 %v1178, %v1241
        %v1243 = vrcp.pop %v1212
        %v1244 = vmul.f32 %v1180, %v1243
        %v1245 = vrcp.pop %v1214
        %v1246 = vmul.f32 %v1182, %v1245
        %v1247 = vrcp.pop %v1216
        %v1248 = vmul.f32 %v1184, %v1247
        %1249 = vst [vmem:[%s272] sm:$0xff] %v1218
        %1250 = vst [vmem:[%s272 + $0x8] sm:$0xff] %v1220
        %1251 = vst [vmem:[%s272 + $0x10] sm:$0xff] %v1222
        %1252 = vst [vmem:[%s272 + $0x18] sm:$0xff] %v1224
        %1253 = vst [vmem:[%s272 + $0x20] sm:$0xff] %v1226
        %1254 = vst [vmem:[%s272 + $0x28] sm:$0xff] %v1228
        %1255 = vst [vmem:[%s272 + $0x30] sm:$0xff] %v1230
        %1256 = vst [vmem:[%s272 + $0x38] sm:$0xff] %v1232
        %1257 = vst [vmem:[%s272 + $0x40] sm:$0xff] %v1234
        %1258 = vst [vmem:[%s272 + $0x48] sm:$0xff] %v1236
        %1259 = vst [vmem:[%s272 + $0x50] sm:$0xff] %v1238
        %1260 = vst [vmem:[%s272 + $0x58] sm:$0xff] %v1240
        %1261 = vst [vmem:[%s272 + $0x60] sm:$0xff] %v1242
        %1262 = vst [vmem:[%s272 + $0x68] sm:$0xff] %v1244
        %1263 = vst [vmem:[%s272 + $0x70] sm:$0xff] %v1246
        %1264 = vst [vmem:[%s272 + $0x78] sm:$0xff] %v1248
        %s1265 = sand.u32 %s181, 1
        %s1266 = scalar_lea.sflag [#allocation3], %s1265
        %s1267 = sand.u32 %s181, 1
        %s1268 = smul.addr %s1267, 128
        %s1269 = scalar_lea.vmem [#allocation2], %s1268
        // Predicated region
        $region49: #{tpu_custom_call.1} parent=47 // pred_check
          %p1270 = pneg %p191
        $region50: #{tpu_custom_call.1} parent=47 // pred_check_branch
          %1272 = sbr.rel (%p1270) target = $region52
        $region51: #{tpu_custom_call.1} parent=47 // pred_region
          %s1273 = smul.u32 16, %s21
          %s1275 = ssub.s32 2048, 2048
          %1276 = vsyncadd %s1266, %s1275
          %s1277 = smul.addr %s1273, 128
          %s1278 = scalar_lea.hbm %s7, %s1277
          %s1279 = sshll.u32 %s1269, 4
          %s1280 = int_to_ptr.vmem [resolvable:$true] %s1279
          %1285 = dma.vmem_to_hbm [thread:$0]  %s1280, 2048, %s1278, %s1266, 128, 128, 8
        $region52: #{tpu_custom_call.1} parent=47 // pred_fallthru
          _
      $region48: #{tpu_custom_call.1} parent=5 // pred_fallthru
        _
      %p1286 = scmp.le.s32.totalorder 2, %s16
      // Predicated region
      $region53: #{tpu_custom_call.1} parent=5 // pred_check
        %p1287 = pneg %p1286
      $region54: #{tpu_custom_call.1} parent=5 // pred_check_branch
        %1289 = sbr.rel (%p1287) target = $region56
      $region55: #{tpu_custom_call.1} parent=5 // pred_region
        %s1290 = ssub.s32 %s16, 2
        // Predicated region
        $region57: #{tpu_custom_call.1} parent=55 // pred_check
          %p1291 = pneg %p197
        $region58: #{tpu_custom_call.1} parent=55 // pred_check_branch
          %1293 = sbr.rel (%p1291) target = $region60
        $region59: #{tpu_custom_call.1} parent=55 // pred_region
          %s1294 = sand.u32 %s182, 1
          %s1295 = scalar_lea.sflag [#allocation3], %s1294
          %s1296 = sand.u32 %s182, 1
          %s1297 = smul.addr %s1296, 128
          %s1298 = scalar_lea.vmem [#allocation2], %s1297
          %1299 = dma.done %s1295, 2048
        $region60: #{tpu_custom_call.1} parent=55 // pred_fallthru
          _
      $region56: #{tpu_custom_call.1} parent=5 // pred_fallthru
        _
    $region6: #{tpu_custom_call.1} parent=1 // loop_footer
      %s20 = sadd.s32 1, %s16
    $region7: #{tpu_custom_call.1} parent=1 // loop_footer_branch
      %15 = sbr.rel target = $region3
    $region8: #{tpu_custom_call.1} parent=1 // loop_exit
      _
    %1300 = vsyncpa [#allocation3], 1
    %s1301 = scalar_lea.sflag [#allocation3], 1
    %1302 = vsyncpa %s1301, 1

</llo_original>
